<compile_context>
chip_gen: v5e
topology: v5e:2x2
jax: 0.10.0
libtpu: 0.0.40
codegen_flags: <defaults>
</compile_context>

<pallas_src>
import jax
import jax.numpy as jnp
from jax.experimental import pallas as pl
from jax.experimental.pallas import tpu as pltpu


def _round_up(n, m):
    return ((n + m - 1) // m) * m


def mlp1relu3_kernel(x_ref, w1_ref, b1_ref, w2_ref, b2_ref, o_ref):
    # fc1: (TB, D) @ (D, H), f32 accumulation on the MXU.
    h = jnp.dot(x_ref[...], w1_ref[...], preferred_element_type=jnp.float32)
    # Bias + ReLU in f32 (keeps v5e off the emulated-bf16 VPU path).
    h = jnp.maximum(h + b1_ref[...], 0.0)
    # Dropout(p=0.3): eval-mode identity.
    # fc2: (TB, H) @ (H, C_pad), f32 accumulation.
    out = jnp.dot(h.astype(w2_ref.dtype), w2_ref[...],
                  preferred_element_type=jnp.float32)
    o_ref[...] = (out + b2_ref[...]).astype(o_ref.dtype)


def mlp1relu3_forward(x, w1, b1, w2, b2, *, block_b=128,
                      compute_dtype=jnp.bfloat16, out_dtype=jnp.float32):
    """Fused fc1 -> ReLU -> Dropout(eval) -> fc2.

    x: (B, D); w1: (D, H); b1: (H,) or (1, H); w2: (H, C); b2: (C,) or (1, C).
    """
    B, D = x.shape
    H = w1.shape[1]
    C = w2.shape[1]

    # Lane-dense output: pad C up to a multiple of 128.
    C_pad = _round_up(max(C, 128), 128)
    # Batch tile: multiple of 8 sublanes, at most block_b rows per grid step.
    TB = min(block_b, _round_up(B, 8))
    B_pad = _round_up(B, TB)

    # bf16 matmul operands, f32 biases.
    x_p = jnp.pad(x, ((0, B_pad - B), (0, 0))).astype(compute_dtype)
    w1_c = w1.astype(compute_dtype)
    w2_p = jnp.pad(w2.astype(compute_dtype), ((0, 0), (0, C_pad - C)))
    b1_r = b1.reshape(1, H).astype(jnp.float32)
    b2_r = jnp.pad(b2.reshape(1, C).astype(jnp.float32), ((0, 0), (0, C_pad - C)))

    grid = (B_pad // TB,)

    in_bytes = jnp.dtype(compute_dtype).itemsize
    out_bytes = jnp.dtype(out_dtype).itemsize
    cost = pl.CostEstimate(
        flops=2 * B_pad * D * H + 2 * B_pad * H * C_pad,
        transcendentals=0,
        bytes_accessed=(B_pad * D * in_bytes + D * H * in_bytes
                        + H * C_pad * in_bytes + (H + C_pad) * 4
                        + B_pad * C_pad * out_bytes),
    )

    out = pl.pallas_call(
        mlp1relu3_kernel,
        out_shape=jax.ShapeDtypeStruct((B_pad, C_pad), out_dtype),
        grid_spec=pltpu.PrefetchScalarGridSpec(
            num_scalar_prefetch=0,
            grid=grid,
            in_specs=[
                pl.BlockSpec((TB, D), lambda i: (i, 0)),      # x: tiled over batch
                pl.BlockSpec((D, H), lambda i: (0, 0)),       # w1: VMEM-resident
                pl.BlockSpec((1, H), lambda i: (0, 0)),       # b1: VMEM-resident
                pl.BlockSpec((H, C_pad), lambda i: (0, 0)),   # w2: VMEM-resident
                pl.BlockSpec((1, C_pad), lambda i: (0, 0)),   # b2: VMEM-resident
            ],
            out_specs=pl.BlockSpec((TB, C_pad), lambda i: (i, 0)),
        ),
        compiler_params=pltpu.CompilerParams(
            dimension_semantics=("parallel",),   # shard batch tiles across TCs (v7x)
            vmem_limit_bytes=32 * 1024 * 1024,
        ),
        cost_estimate=cost,
    )(x_p, w1_c, b1_r, w2_p, b2_r)

    return out[:B, :C]


def init_params(key, input_size, inter, num_classes, dtype=jnp.float32):
    """Deterministic init mimicking nn.Linear's uniform(-1/sqrt(fan_in), 1/sqrt(fan_in))."""
    k1, k2, k3, k4 = jax.random.split(key, 4)
    bound1 = 1.0 / (input_size ** 0.5)
    bound2 = 1.0 / (inter ** 0.5)
    # Stored as (in_features, out_features) == PyTorch weight.T
    w1 = jax.random.uniform(k1, (input_size, inter), dtype, -bound1, bound1)
    b1 = jax.random.uniform(k2, (1, inter), dtype, -bound1, bound1)
    w2 = jax.random.uniform(k3, (inter, num_classes), dtype, -bound2, bound2)
    b2 = jax.random.uniform(k4, (1, num_classes), dtype, -bound2, bound2)
    return w1, b1, w2, b2


def reference_forward_bf16(x, w1, b1, w2, b2, compute_dtype=jnp.bfloat16):
    """Same math as the kernel (bf16 operands, f32 accumulate/elementwise)."""
    xc = x.astype(compute_dtype)
    w1c = w1.astype(compute_dtype)
    w2c = w2.astype(compute_dtype)
    h = jnp.dot(xc, w1c, preferred_element_type=jnp.float32) + b1.astype(jnp.float32)
    h = jnp.maximum(h, 0.0)
    out = jnp.dot(h.astype(compute_dtype), w2c, preferred_element_type=jnp.float32)
    return out + b2.astype(jnp.float32)


def reference_forward_f32(x, w1, b1, w2, b2):
    h = jnp.maximum(x @ w1 + b1, 0.0)
    return h @ w2 + b2


if __name__ == "__main__":
    # Small MLP-over-flattened-input shapes; batch=256 exercises the 2-tile grid.
    batch = 256
    input_size = 256
    inter = 128
    num_classes = 10

    key = jax.random.PRNGKey(0)
    kx, kp = jax.random.split(key)
    x = jax.random.normal(kx, (batch, input_size), dtype=jnp.float32)
    w1, b1, w2, b2 = init_params(kp, input_size, inter, num_classes)

    out = mlp1relu3_forward(x, w1, b1, w2, b2)
    out = jax.block_until_ready(out)
    assert out.shape == (batch, num_classes)

    # Tight check against an identical-math (bf16 operands, f32 accumulate) reference.
    ref_bf16 = reference_forward_bf16(x, w1, b1, w2, b2)
    assert jnp.allclose(out, ref_bf16, atol=1e-2, rtol=1e-2), "mismatch vs bf16 reference"

    # Loose sanity check against the full-f32 PyTorch-equivalent math.
    ref_f32 = reference_forward_f32(x, w1, b1, w2, b2)
    assert jnp.allclose(out, ref_f32, atol=1e-1, rtol=5e-2), "mismatch vs f32 reference"

    print("KERNEL_OK")
</pallas_src>

<mosaic_0001>
module attributes {stable_mosaic.version = 11 : i64} {
  func.func @mlp1relu3_kernel(%arg0: i32, %arg1: memref<128x256xbf16, #tpu.memory_space<vmem>>, %arg2: memref<256x128xbf16, #tpu.memory_space<vmem>>, %arg3: memref<1x128xf32, #tpu.memory_space<vmem>>, %arg4: memref<128x128xbf16, #tpu.memory_space<vmem>>, %arg5: memref<1x128xf32, #tpu.memory_space<vmem>>, %arg6: memref<128x128xf32, #tpu.memory_space<vmem>>) attributes {dimension_semantics = [#tpu.dimension_semantics<parallel>], iteration_bounds = array<i64: 2>, scalar_prefetch = 0 : i64, scratch_operands = 0 : i64, tpu.core_type = #tpu.core_type<tc>, window_params = [{transform_indices = @transform_0, window_bounds = array<i64: 128, 256>}, {pipeline_mode = #tpu.pipeline_mode<synchronous>, transform_indices = @transform_1, window_bounds = array<i64: 256, 128>}, {pipeline_mode = #tpu.pipeline_mode<synchronous>, transform_indices = @transform_2, window_bounds = array<i64: 1, 128>}, {pipeline_mode = #tpu.pipeline_mode<synchronous>, transform_indices = @transform_3, window_bounds = array<i64: 128, 128>}, {pipeline_mode = #tpu.pipeline_mode<synchronous>, transform_indices = @transform_4, window_bounds = array<i64: 1, 128>}, {transform_indices = @transform_5, window_bounds = array<i64: 128, 128>}]} {
    %c0 = arith.constant 0 : index
    %c0_0 = arith.constant 0 : index
    %0 = vector.load %arg1[%c0, %c0_0] : memref<128x256xbf16, #tpu.memory_space<vmem>>, vector<128x256xbf16>
    %c0_1 = arith.constant 0 : index
    %c0_2 = arith.constant 0 : index
    %1 = vector.load %arg2[%c0_1, %c0_2] : memref<256x128xbf16, #tpu.memory_space<vmem>>, vector<256x128xbf16>
    %cst = arith.constant dense<0.000000e+00> : vector<128x128xf32>
    %2 = tpu.matmul %0, %1, %cst {dimension_numbers = #tpu.dot_dimension_numbers<[1], [0], [0], [1], [0, 0, 1, 1], [], []>} : vector<128x256xbf16>, vector<256x128xbf16>, vector<128x128xf32> -> vector<128x128xf32>
    %c0_3 = arith.constant 0 : index
    %c0_4 = arith.constant 0 : index
    %3 = vector.load %arg3[%c0_3, %c0_4] : memref<1x128xf32, #tpu.memory_space<vmem>>, vector<1x128xf32>
    %4 = vector.broadcast %3 : vector<1x128xf32> to vector<128x128xf32>
    %5 = arith.addf %2, %4 : vector<128x128xf32>
    %cst_5 = arith.constant 0.000000e+00 : f32
    %6 = vector.broadcast %cst_5 : f32 to vector<128x128xf32>
    %7 = arith.maximumf %5, %6 : vector<128x128xf32>
    %8 = arith.truncf %7 : vector<128x128xf32> to vector<128x128xbf16>
    %c0_6 = arith.constant 0 : index
    %c0_7 = arith.constant 0 : index
    %9 = vector.load %arg4[%c0_6, %c0_7] : memref<128x128xbf16, #tpu.memory_space<vmem>>, vector<128x128xbf16>
    %cst_8 = arith.constant dense<0.000000e+00> : vector<128x128xf32>
    %10 = tpu.matmul %8, %9, %cst_8 {dimension_numbers = #tpu.dot_dimension_numbers<[1], [0], [0], [1], [0, 0, 1, 1], [], []>} : vector<128x128xbf16>, vector<128x128xbf16>, vector<128x128xf32> -> vector<128x128xf32>
    %c0_9 = arith.constant 0 : index
    %c0_10 = arith.constant 0 : index
    %11 = vector.load %arg5[%c0_9, %c0_10] : memref<1x128xf32, #tpu.memory_space<vmem>>, vector<1x128xf32>
    %12 = vector.broadcast %11 : vector<1x128xf32> to vector<128x128xf32>
    %13 = arith.addf %10, %12 : vector<128x128xf32>
    %c0_11 = arith.constant 0 : index
    %c0_12 = arith.constant 0 : index
    %14 = vector.load %arg6[%c0_11, %c0_12] : memref<128x128xf32, #tpu.memory_space<vmem>>, vector<128x128xf32>
    tpu.vector_store %arg6[%c0_11, %c0_12], %13 {strides = array<i32>} : memref<128x128xf32, #tpu.memory_space<vmem>>, vector<128x128xf32>,
    return
  }
  func.func @transform_0(%arg0: i32) -> (i32, i32) {
    %c0_i32 = arith.constant 0 : i32
    %c0_i32_0 = arith.constant 0 : i32
    return %arg0, %c0_i32 : i32, i32
  }
  func.func @transform_1(%arg0: i32) -> (i32, i32) {
    %c0_i32 = arith.constant 0 : i32
    %c0_i32_0 = arith.constant 0 : i32
    %c0_i32_1 = arith.constant 0 : i32
    return %c0_i32, %c0_i32_0 : i32, i32
  }
  func.func @transform_2(%arg0: i32) -> (i32, i32) {
    %c0_i32 = arith.constant 0 : i32
    %c0_i32_0 = arith.constant 0 : i32
    %c0_i32_1 = arith.constant 0 : i32
    return %c0_i32, %c0_i32_0 : i32, i32
  }
  func.func @transform_3(%arg0: i32) -> (i32, i32) {
    %c0_i32 = arith.constant 0 : i32
    %c0_i32_0 = arith.constant 0 : i32
    %c0_i32_1 = arith.constant 0 : i32
    return %c0_i32, %c0_i32_0 : i32, i32
  }
  func.func @transform_4(%arg0: i32) -> (i32, i32) {
    %c0_i32 = arith.constant 0 : i32
    %c0_i32_0 = arith.constant 0 : i32
    %c0_i32_1 = arith.constant 0 : i32
    return %c0_i32, %c0_i32_0 : i32, i32
  }
  func.func @transform_5(%arg0: i32) -> (i32, i32) {
    %c0_i32 = arith.constant 0 : i32
    %c0_i32_0 = arith.constant 0 : i32
    return %arg0, %c0_i32 : i32, i32
  }
}

</mosaic_0001>

<llo_original>
// kernel: tpu_custom_call.1
$region0: #{tpu_custom_call.1}
  #allocation0 [shape = 'u32[]', space=smem, size = 0x4, offset = 0x4, fixed_abs, tag = 'smem constant byte address 0x4 - core index']
  #allocation1 [shape = 'u32[72,128]{1,0:T(1,128)}', space=vmem, size = 0x9000, scoped, tag = 'internal scratch']
  %s0 = inlined_call_operand.hbm [shape: bf16[256,256], index: 0, kind: input, shape index: {}]
  %s1 = inlined_call_operand.hbm [shape: bf16[256,128], index: 1, kind: input, shape index: {}]
  %s2 = inlined_call_operand.vmem [shape: f32[1,128], index: 2, kind: input, shape index: {}]
  %s3 = inlined_call_operand.hbm [shape: bf16[128,128], index: 3, kind: input, shape index: {}]
  %s4 = inlined_call_operand.vmem [shape: f32[1,128], index: 4, kind: input, shape index: {}]
  %s5 = inlined_call_operand.hbm [shape: f32[256,128], index: 5, kind: output, shape index: {}]
  %s6 = sld [smem:[#allocation0]]
  $region65: #{tpu_custom_call.1} parent=0
    _
  %s8 = ssub.s32 1, %s6
  %s9 = scalar_select 0, %s8, %s6
  $region1: #{tpu_custom_call.1} parent=0
    #allocation2 [shape = 'u8[131072]{0}', space=vmem, size = 0x20000, scoped, tag = 'input window, operand 0']
    #allocation3 [shape = 's32[2]{0}', space=sflag, size = 0x8, scoped, tag = 'scoped memory for tpu_custom_call.1']
    #allocation4 [shape = 's32[2]{0}', space=sflag, size = 0x8, scoped, tag = 'scoped memory for tpu_custom_call.1']
    #allocation5 [shape = 'u8[65536]{0}', space=vmem, size = 0x10000, scoped, tag = 'input window, operand 1, single buffered']
    #allocation6 [shape = 's32[1]{0}', space=sflag, size = 0x4, scoped, tag = 'scoped memory for tpu_custom_call.1']
    #allocation7 [shape = 'u8[32768]{0}', space=vmem, size = 0x8000, scoped, tag = 'input window, operand 3, single buffered']
    #allocation8 [shape = 'u8[131072]{0}', space=vmem, size = 0x20000, scoped, tag = 'output window, operand 0']
    %10 = vsyncpa [#allocation3], 0
    %s11 = scalar_lea.sflag [#allocation3], 1
    %12 = vsyncpa %s11, 0
    %13 = vsyncpa [#allocation6], 0
    %14 = vsyncpa [#allocation4], 0
    %s15 = scalar_lea.sflag [#allocation4], 1
    %16 = vsyncpa %s15, 0
    loop: start=0, step=1, limit=4
    $region2: #{tpu_custom_call.1} parent=1 // loop_pre_header
      _
    $region3: #{tpu_custom_call.1} parent=1 // loop_header
      %s18 = sphi 0, %s22
      %p19 = scmp.ge.s32.totalorder %s18, 4
      %s28 = sphi 0, %s30
      %s31 = sphi 0, %s28
      %s32 = sphi 0, %s31
      %s48 = sphi 0, %s32
      %s52 = sphi 0, %s52
      %s54 = sphi 0, %s52
      %s55 = sphi 0, %s54
      %s69 = sphi 0, %s55
      %s73 = sphi 0, %s73
      %s75 = sphi 0, %s73
      %s76 = sphi 0, %s75
      %s90 = sphi 0, %s76
      %s94 = sphi 0, %s94
      %s96 = sphi 0, %s94
      %s97 = sphi 0, %s96
      %s111 = sphi 0, %s97
      %s115 = sphi 0, %s115
      %s117 = sphi 0, %s115
      %s118 = sphi 0, %s117
      %s132 = sphi 0, %s118
      %s138 = sphi 0, %s140
      %s141 = sphi 0, %s138
      %s142 = sphi 0, %s141
      %s158 = sphi 0, %s142
    $region4: #{tpu_custom_call.1} parent=1 // loop_header_branch
      %21 = sbr.rel (%p19) target = $region8
    $region5: #{tpu_custom_call.1} parent=1 // loop_body
      %s23 = ssub.s32 %s18, 1
      %s24 = ssub.s32 %s18, 2
      %s25 = sadd.s32 %s18, 1
      %s26 = ssub.s32 %s18, %s25
      %p27 = scmp.eq.s32.totalorder %s26, 0
      %s29 = sadd.s32 %s28, 1
      %s30 = scalar_select %p27, %s28, %s29
      %p33 = pneg %p27
      %p34 = scmp.eq.s32.totalorder %s18, 1
      %p35 = por %p33, %p34
      %p36 = scmp.ne.s32.totalorder %s28, %s31
      %p37 = scmp.eq.s32.totalorder %s18, 0
      %p38 = por %p36, %p37
      %p39 = scmp.ne.s32.totalorder %s28, %s31
      %p40 = scmp.eq.s32.totalorder %s23, 1
      %p41 = por %p39, %p40
      %p42 = scmp.ne.s32.totalorder %s31, %s32
      %p43 = scmp.eq.s32.totalorder %s23, 0
      %p44 = por %p42, %p43
      %p45 = scmp.ne.s32.totalorder %s31, %s32
      %p46 = scmp.eq.s32.totalorder %s24, 1
      %p47 = por %p45, %p46
      %p49 = scmp.ne.s32.totalorder %s32, %s48
      %p50 = scmp.eq.s32.totalorder %s24, 0
      %p51 = por %p49, %p50
      %s53 = sadd.s32 %s52, 1
      %p56 = scmp.eq.s32.totalorder %s18, 1
      %p57 = scmp.ne.s32.totalorder %s52, %s54
      %p58 = scmp.eq.s32.totalorder %s18, 0
      %p59 = por %p57, %p58
      %p60 = scmp.ne.s32.totalorder %s52, %s54
      %p61 = scmp.eq.s32.totalorder %s23, 1
      %p62 = por %p60, %p61
      %p63 = scmp.ne.s32.totalorder %s54, %s55
      %p64 = scmp.eq.s32.totalorder %s23, 0
      %p65 = por %p63, %p64
      %p66 = scmp.ne.s32.totalorder %s54, %s55
      %p67 = scmp.eq.s32.totalorder %s24, 1
      %p68 = por %p66, %p67
      %p70 = scmp.ne.s32.totalorder %s55, %s69
      %p71 = scmp.eq.s32.totalorder %s24, 0
      %p72 = por %p70, %p71
      %s74 = sadd.s32 %s73, 1
      %p77 = scmp.eq.s32.totalorder %s18, 1
      %p78 = scmp.ne.s32.totalorder %s73, %s75
      %p79 = scmp.eq.s32.totalorder %s18, 0
      %p80 = por %p78, %p79
      %p81 = scmp.ne.s32.totalorder %s73, %s75
      %p82 = scmp.eq.s32.totalorder %s23, 1
      %p83 = por %p81, %p82
      %p84 = scmp.ne.s32.totalorder %s75, %s76
      %p85 = scmp.eq.s32.totalorder %s23, 0
      %p86 = por %p84, %p85
      %p87 = scmp.ne.s32.totalorder %s75, %s76
      %p88 = scmp.eq.s32.totalorder %s24, 1
      %p89 = por %p87, %p88
      %p91 = scmp.ne.s32.totalorder %s76, %s90
      %p92 = scmp.eq.s32.totalorder %s24, 0
      %p93 = por %p91, %p92
      %s95 = sadd.s32 %s94, 1
      %p98 = scmp.eq.s32.totalorder %s18, 1
      %p99 = scmp.ne.s32.totalorder %s94, %s96
      %p100 = scmp.eq.s32.totalorder %s18, 0
      %p101 = por %p99, %p100
      %p102 = scmp.ne.s32.totalorder %s94, %s96
      %p103 = scmp.eq.s32.totalorder %s23, 1
      %p104 = por %p102, %p103
      %p105 = scmp.ne.s32.totalorder %s96, %s97
      %p106 = scmp.eq.s32.totalorder %s23, 0
      %p107 = por %p105, %p106
      %p108 = scmp.ne.s32.totalorder %s96, %s97
      %p109 = scmp.eq.s32.totalorder %s24, 1
      %p110 = por %p108, %p109
      %p112 = scmp.ne.s32.totalorder %s97, %s111
      %p113 = scmp.eq.s32.totalorder %s24, 0
      %p114 = por %p112, %p113
      %s116 = sadd.s32 %s115, 1
      %p119 = scmp.eq.s32.totalorder %s18, 1
      %p120 = scmp.ne.s32.totalorder %s115, %s117
      %p121 = scmp.eq.s32.totalorder %s18, 0
      %p122 = por %p120, %p121
      %p123 = scmp.ne.s32.totalorder %s115, %s117
      %p124 = scmp.eq.s32.totalorder %s23, 1
      %p125 = por %p123, %p124
      %p126 = scmp.ne.s32.totalorder %s117, %s118
      %p127 = scmp.eq.s32.totalorder %s23, 0
      %p128 = por %p126, %p127
      %p129 = scmp.ne.s32.totalorder %s117, %s118
      %p130 = scmp.eq.s32.totalorder %s24, 1
      %p131 = por %p129, %p130
      %p133 = scmp.ne.s32.totalorder %s118, %s132
      %p134 = scmp.eq.s32.totalorder %s24, 0
      %p135 = por %p133, %p134
      %s136 = ssub.s32 %s18, %s25
      %p137 = scmp.eq.s32.totalorder %s136, 0
      %s139 = sadd.s32 %s138, 1
      %s140 = scalar_select %p137, %s138, %s139
      %p143 = pneg %p137
      %p144 = scmp.eq.s32.totalorder %s18, 1
      %p145 = por %p143, %p144
      %p146 = scmp.ne.s32.totalorder %s138, %s141
      %p147 = scmp.eq.s32.totalorder %s18, 0
      %p148 = por %p146, %p147
      %p149 = scmp.ne.s32.totalorder %s138, %s141
      %p150 = scmp.eq.s32.totalorder %s23, 1
      %p151 = por %p149, %p150
      %p152 = scmp.ne.s32.totalorder %s141, %s142
      %p153 = scmp.eq.s32.totalorder %s23, 0
      %p154 = por %p152, %p153
      %p155 = scmp.ne.s32.totalorder %s141, %s142
      %p156 = scmp.eq.s32.totalorder %s24, 1
      %p157 = por %p155, %p156
      %p159 = scmp.ne.s32.totalorder %s142, %s158
      %p160 = scmp.eq.s32.totalorder %s24, 0
      %p161 = por %p159, %p160
      %p162 = scmp.le.s32.totalorder 1, %s18
      %p163 = scmp.lt.s32.totalorder %s18, 3
      %p164 = pnand %p162, %p163
      %p165 = pneg %p164
      // Predicated region
      $region9: #{tpu_custom_call.1} parent=5 // pred_check
        _
      $region10: #{tpu_custom_call.1} parent=5 // pred_check_branch
        %167 = sbr.rel (%p164) target = $region12
      $region11: #{tpu_custom_call.1} parent=5 // pred_region
        %s168 = ssub.s32 %s18, 1
        // Predicated region
        $region13: #{tpu_custom_call.1} parent=11 // pred_check
          %p169 = pneg %p65
        $region14: #{tpu_custom_call.1} parent=11 // pred_check_branch
          %171 = sbr.rel (%p169) target = $region16
        $region15: #{tpu_custom_call.1} parent=11 // pred_region
          %173 = vsyncadd [#allocation6], 0
          %s174 = sshll.u32 %s1, 4
          %s175 = int_to_ptr.hbm [resolvable:$true] %s174
          %s176 = sshll.u32 [#allocation5], 4
          %s177 = int_to_ptr.vmem [resolvable:$true] %s176
          %182 = dma.hbm_to_vmem [thread:$0]  %s175, 2048, %s177, [#allocation6], 64, 64, 4
        $region16: #{tpu_custom_call.1} parent=11 // pred_fallthru
          _
        // Predicated region
        $region17: #{tpu_custom_call.1} parent=11 // pred_check
          %p183 = pneg %p86
        $region18: #{tpu_custom_call.1} parent=11 // pred_check_branch
          %185 = sbr.rel (%p183) target = $region20
        $region19: #{tpu_custom_call.1} parent=11 // pred_region
          _
        $region20: #{tpu_custom_call.1} parent=11 // pred_fallthru
          _
        // Predicated region
        $region21: #{tpu_custom_call.1} parent=11 // pred_check
          %p186 = pneg %p107
        $region22: #{tpu_custom_call.1} parent=11 // pred_check_branch
          %188 = sbr.rel (%p186) target = $region24
        $region23: #{tpu_custom_call.1} parent=11 // pred_region
          %190 = vsyncadd [#allocation6], 0
          %s191 = sshll.u32 %s3, 4
          %s192 = int_to_ptr.hbm [resolvable:$true] %s191
          %s193 = sshll.u32 [#allocation7], 4
          %s194 = int_to_ptr.vmem [resolvable:$true] %s193
          %199 = dma.hbm_to_vmem [thread:$0]  %s192, 1024, %s194, [#allocation6], 64, 64, 4
        $region24: #{tpu_custom_call.1} parent=11 // pred_fallthru
          _
        // Predicated region
        $region25: #{tpu_custom_call.1} parent=11 // pred_check
          %p200 = pneg %p128
        $region26: #{tpu_custom_call.1} parent=11 // pred_check_branch
          %202 = sbr.rel (%p200) target = $region28
        $region27: #{tpu_custom_call.1} parent=11 // pred_region
          _
        $region28: #{tpu_custom_call.1} parent=11 // pred_fallthru
          _
      $region12: #{tpu_custom_call.1} parent=5 // pred_fallthru
        _
      %p203 = scmp.lt.s32.totalorder %s18, 2
      // Predicated region
      $region29: #{tpu_custom_call.1} parent=5 // pred_check
        %p204 = pneg %p203
      $region30: #{tpu_custom_call.1} parent=5 // pred_check_branch
        %206 = sbr.rel (%p204) target = $region32
      $region31: #{tpu_custom_call.1} parent=5 // pred_region
        // Predicated region
        $region33: #{tpu_custom_call.1} parent=31 // pred_check
          %p207 = pneg %p38
        $region34: #{tpu_custom_call.1} parent=31 // pred_check_branch
          %209 = sbr.rel (%p207) target = $region36
        $region35: #{tpu_custom_call.1} parent=31 // pred_region
          %s210 = sand.u32 %s28, 1
          %s211 = scalar_lea.sflag [#allocation3], %s210
          %s212 = sand.u32 %s28, 1
          %s213 = smul.addr %s212, 128
          %s214 = scalar_lea.vmem [#allocation2], %s213
          %s215 = smul.u32 16, %s18
          %217 = vsyncadd %s211, 0
          %s218 = smul.addr %s215, 2
          %s219 = smul.addr %s218, 4
          %s220 = scalar_lea.hbm %s0, %s219
          %s221 = sshll.u32 %s220, 4
          %s222 = int_to_ptr.hbm [resolvable:$true] %s221
          %s223 = sshll.u32 %s214, 4
          %s224 = int_to_ptr.vmem [resolvable:$true] %s223
          %229 = dma.hbm_to_vmem [thread:$0]  %s222, 2048, %s224, %s211, 128, 128, 8
        $region36: #{tpu_custom_call.1} parent=31 // pred_fallthru
          _
      $region32: #{tpu_custom_call.1} parent=5 // pred_fallthru
        _
      %p230 = scmp.le.s32.totalorder 1, %s18
      %p231 = scmp.lt.s32.totalorder %s18, 3
      %p232 = pnand %p230, %p231
      %p233 = pneg %p232
      // Predicated region
      $region37: #{tpu_custom_call.1} parent=5 // pred_check
        _
      $region38: #{tpu_custom_call.1} parent=5 // pred_check_branch
        %235 = sbr.rel (%p232) target = $region40
      $region39: #{tpu_custom_call.1} parent=5 // pred_region
        %s236 = ssub.s32 %s18, 1
        %s237 = sand.u32 %s31, 1
        %s238 = scalar_lea.sflag [#allocation3], %s237
        %s239 = sand.u32 %s31, 1
        %s240 = smul.addr %s239, 128
        %s241 = scalar_lea.vmem [#allocation2], %s240
        // Predicated region
        $region41: #{tpu_custom_call.1} parent=39 // pred_check
          %p242 = pneg %p44
        $region42: #{tpu_custom_call.1} parent=39 // pred_check_branch
          %244 = sbr.rel (%p242) target = $region44
        $region43: #{tpu_custom_call.1} parent=39 // pred_region
          %246 = dma.done %s238, 2048
        $region44: #{tpu_custom_call.1} parent=39 // pred_fallthru
          _
        // Predicated region
        $region45: #{tpu_custom_call.1} parent=39 // pred_check
          %p247 = pneg %p65
        $region46: #{tpu_custom_call.1} parent=39 // pred_check_branch
          %249 = sbr.rel (%p247) target = $region48
        $region47: #{tpu_custom_call.1} parent=39 // pred_region
          %251 = dma.done [#allocation6], 2048
        $region48: #{tpu_custom_call.1} parent=39 // pred_fallthru
          _
        // Predicated region
        $region49: #{tpu_custom_call.1} parent=39 // pred_check
          %p252 = pneg %p107
        $region50: #{tpu_custom_call.1} parent=39 // pred_check_branch
          %254 = sbr.rel (%p252) target = $region52
        $region51: #{tpu_custom_call.1} parent=39 // pred_region
          %256 = dma.done [#allocation6], 1024
        $region52: #{tpu_custom_call.1} parent=39 // pred_fallthru
          _
        %s257 = sand.u32 %s31, 1
        %s258 = scalar_lea.sflag [#allocation3], %s257
        %s259 = sand.u32 %s31, 1
        %s260 = smul.addr %s259, 128
        %s261 = scalar_lea.vmem [#allocation2], %s260
        %p262 = pneg %p44
        %p263 = pneg %p41
        %p264 = pneg %p65
        %p265 = pneg %p62
        %p266 = pneg %p86
        %p267 = pneg %p83
        %p268 = pneg %p107
        %p269 = pneg %p104
        %p270 = pneg %p128
        %p271 = pneg %p125
        %p272 = pneg %p154
        %p273 = pneg %p151
        %s274 = sand.u32 %s141, 1
        %s275 = scalar_lea.sflag [#allocation4], %s274
        %s276 = sand.u32 %s141, 1
        %s277 = smul.addr %s276, 128
        %s278 = scalar_lea.vmem [#allocation8], %s277
        %s279 = smul.u32 16, %s23
        %s280 = smul.u32 16, %s23
        %v281 = vld [vmem:[%s241] sm:$0xff]
        %v282 = vld [vmem:[%s241 + $0x8] sm:$0xff]
        %v283 = vld [vmem:[%s241 + $0x10] sm:$0xff]
        %v284 = vld [vmem:[%s241 + $0x18] sm:$0xff]
        %v285 = vld [vmem:[%s241 + $0x20] sm:$0xff]
        %v286 = vld [vmem:[%s241 + $0x28] sm:$0xff]
        %v287 = vld [vmem:[%s241 + $0x30] sm:$0xff]
        %v288 = vld [vmem:[%s241 + $0x38] sm:$0xff]
        %v289 = vld [vmem:[%s241 + $0x40] sm:$0xff]
        %v290 = vld [vmem:[%s241 + $0x48] sm:$0xff]
        %v291 = vld [vmem:[%s241 + $0x50] sm:$0xff]
        %v292 = vld [vmem:[%s241 + $0x58] sm:$0xff]
        %v293 = vld [vmem:[%s241 + $0x60] sm:$0xff]
        %v294 = vld [vmem:[%s241 + $0x68] sm:$0xff]
        %v295 = vld [vmem:[%s241 + $0x70] sm:$0xff]
        %v296 = vld [vmem:[%s241 + $0x78] sm:$0xff]
        %v297 = vld [vmem:[#allocation5] sm:$0xf]
        %v298 = vld [vmem:[#allocation5 + $0x4] sm:$0xf]
        %v299 = vld [vmem:[#allocation5 + $0x8] sm:$0xf]
        %v300 = vld [vmem:[#allocation5 + $0xc] sm:$0xf]
        %v301 = vld [vmem:[#allocation5 + $0x10] sm:$0xf]
        %v302 = vld [vmem:[#allocation5 + $0x14] sm:$0xf]
        %v303 = vld [vmem:[#allocation5 + $0x18] sm:$0xf]
        %v304 = vld [vmem:[#allocation5 + $0x1c] sm:$0xf]
        %v305 = vld [vmem:[#allocation5 + $0x20] sm:$0xf]
        %v306 = vld [vmem:[#allocation5 + $0x24] sm:$0xf]
        %v307 = vld [vmem:[#allocation5 + $0x28] sm:$0xf]
        %v308 = vld [vmem:[#allocation5 + $0x2c] sm:$0xf]
        %v309 = vld [vmem:[#allocation5 + $0x30] sm:$0xf]
        %v310 = vld [vmem:[#allocation5 + $0x34] sm:$0xf]
        %v311 = vld [vmem:[#allocation5 + $0x38] sm:$0xf]
        %v312 = vld [vmem:[#allocation5 + $0x3c] sm:$0xf]
        %v313 = vld [vmem:[#allocation5 + $0x40] sm:$0xf]
        %v314 = vld [vmem:[#allocation5 + $0x44] sm:$0xf]
        %v315 = vld [vmem:[#allocation5 + $0x48] sm:$0xf]
        %v316 = vld [vmem:[#allocation5 + $0x4c] sm:$0xf]
        %v317 = vld [vmem:[#allocation5 + $0x50] sm:$0xf]
        %v318 = vld [vmem:[#allocation5 + $0x54] sm:$0xf]
        %v319 = vld [vmem:[#allocation5 + $0x58] sm:$0xf]
        %v320 = vld [vmem:[#allocation5 + $0x5c] sm:$0xf]
        %v321 = vld [vmem:[#allocation5 + $0x60] sm:$0xf]
        %v322 = vld [vmem:[#allocation5 + $0x64] sm:$0xf]
        %v323 = vld [vmem:[#allocation5 + $0x68] sm:$0xf]
        %v324 = vld [vmem:[#allocation5 + $0x6c] sm:$0xf]
        %v325 = vld [vmem:[#allocation5 + $0x70] sm:$0xf]
        %v326 = vld [vmem:[#allocation5 + $0x74] sm:$0xf]
        %v327 = vld [vmem:[#allocation5 + $0x78] sm:$0xf]
        %v328 = vld [vmem:[#allocation5 + $0x7c] sm:$0xf]
        %v329 = vld [vmem:[%s2] sm:$0x1]
        %v331 = vperm.slane %v329, 0
        %v349 = vunpack.c.l.b16 %v281
        %v350 = vunpack.c.h.b16 %v281
        %v351 = vunpack.c.l.b16 %v282
        %v352 = vunpack.c.h.b16 %v282
        %v353 = vunpack.c.l.b16 %v283
        %v354 = vunpack.c.h.b16 %v283
        %v355 = vunpack.c.l.b16 %v284
        %v356 = vunpack.c.h.b16 %v284
        %v357 = vunpack.c.l.b16 %v285
        %v358 = vunpack.c.h.b16 %v285
        %v359 = vunpack.c.l.b16 %v286
        %v360 = vunpack.c.h.b16 %v286
        %v361 = vunpack.c.l.b16 %v287
        %v362 = vunpack.c.h.b16 %v287
        %v363 = vunpack.c.l.b16 %v288
        %v364 = vunpack.c.h.b16 %v288
        %v365 = vunpack.c.l.b16 %v289
        %v366 = vunpack.c.h.b16 %v289
        %v367 = vunpack.c.l.b16 %v290
        %v368 = vunpack.c.h.b16 %v290
        %v369 = vunpack.c.l.b16 %v291
        %v370 = vunpack.c.h.b16 %v291
        %v371 = vunpack.c.l.b16 %v292
        %v372 = vunpack.c.h.b16 %v292
        %v373 = vunpack.c.l.b16 %v293
        %v374 = vunpack.c.h.b16 %v293
        %v375 = vunpack.c.l.b16 %v294
        %v376 = vunpack.c.h.b16 %v294
        %v377 = vunpack.c.l.b16 %v295
        %v378 = vunpack.c.h.b16 %v295
        %v379 = vunpack.c.l.b16 %v296
        %v380 = vunpack.c.h.b16 %v296
        %v381 = vpack.c.b16 %v351, %v349
        %v382 = vpack.c.b16 %v352, %v350
        %v383 = vpack.c.b16 %v355, %v353
        %v384 = vpack.c.b16 %v356, %v354
        %v385 = vpack.c.b16 %v359, %v357
        %v386 = vpack.c.b16 %v360, %v358
        %v387 = vpack.c.b16 %v363, %v361
        %v388 = vpack.c.b16 %v364, %v362
        %v389 = vpack.c.b16 %v367, %v365
        %v390 = vpack.c.b16 %v368, %v366
        %v391 = vpack.c.b16 %v371, %v369
        %v392 = vpack.c.b16 %v372, %v370
        %v393 = vpack.c.b16 %v375, %v373
        %v394 = vpack.c.b16 %v376, %v374
        %v395 = vpack.c.b16 %v379, %v377
        %v396 = vpack.c.b16 %v380, %v378
        %v445 = vunpack.c.l.b16 %v297
        %v446 = vunpack.c.l.b16 %v298
        %v447 = vunpack.c.l.b16 %v299
        %v448 = vunpack.c.l.b16 %v300
        %v449 = vunpack.c.l.b16 %v301
        %v450 = vunpack.c.l.b16 %v302
        %v451 = vunpack.c.l.b16 %v303
        %v452 = vunpack.c.l.b16 %v304
        %v453 = vunpack.c.l.b16 %v305
        %v454 = vunpack.c.l.b16 %v306
        %v455 = vunpack.c.l.b16 %v307
        %v456 = vunpack.c.l.b16 %v308
        %v457 = vunpack.c.l.b16 %v309
        %v458 = vunpack.c.l.b16 %v310
        %v459 = vunpack.c.l.b16 %v311
        %v460 = vunpack.c.l.b16 %v312
        %v461 = vunpack.c.l.b16 %v313
        %v462 = vunpack.c.l.b16 %v314
        %v463 = vunpack.c.l.b16 %v315
        %v464 = vunpack.c.l.b16 %v316
        %v465 = vunpack.c.l.b16 %v317
        %v466 = vunpack.c.l.b16 %v318
        %v467 = vunpack.c.l.b16 %v319
        %v468 = vunpack.c.l.b16 %v320
        %v469 = vunpack.c.l.b16 %v321
        %v470 = vunpack.c.l.b16 %v322
        %v471 = vunpack.c.l.b16 %v323
        %v472 = vunpack.c.l.b16 %v324
        %v473 = vunpack.c.l.b16 %v325
        %v474 = vunpack.c.l.b16 %v326
        %v475 = vunpack.c.l.b16 %v327
        %v476 = vunpack.c.l.b16 %v328
        %v477 = vpack.c.b16 %v446, %v445
        %v478 = vpack.c.b16 %v448, %v447
        %v479 = vpack.c.b16 %v450, %v449
        %v480 = vpack.c.b16 %v452, %v451
        %v481 = vpack.c.b16 %v454, %v453
        %v482 = vpack.c.b16 %v456, %v455
        %v483 = vpack.c.b16 %v458, %v457
        %v484 = vpack.c.b16 %v460, %v459
        %v485 = vpack.c.b16 %v462, %v461
        %v486 = vpack.c.b16 %v464, %v463
        %v487 = vpack.c.b16 %v466, %v465
        %v488 = vpack.c.b16 %v468, %v467
        %v489 = vpack.c.b16 %v470, %v469
        %v490 = vpack.c.b16 %v472, %v471
        %v491 = vpack.c.b16 %v474, %v473
        %v492 = vpack.c.b16 %v476, %v475
        %509 = vmatpush.bf16.msra.mxu0 %v484
        %510 = vmatpush.bf16.msra.mxu0 %v483
        %511 = vmatpush.bf16.msra.mxu0 %v482
        %512 = vmatpush.bf16.msra.mxu0 %v481
        %513 = vmatpush.bf16.msra.mxu0 %v480
        %514 = vmatpush.bf16.msra.mxu0 %v479
        %515 = vmatpush.bf16.msra.mxu0 %v478
        %516 = vmatpush.bf16.msra.mxu0 %v477
        %517 = vmatmul.bf16.gmra.mxu0 %v381
        %v518 = vpop.f32.mrf.mxu0
        %v519 = vadd.f32 %v331, %v518
        %v520 = vpop.f32.mrf.mxu0
        %v521 = vadd.f32 %v331, %v520
        %522 = vmatmul.bf16.gmra.mxu0 %v383
        %v523 = vpop.f32.mrf.mxu0
        %v524 = vadd.f32 %v331, %v523
        %v525 = vpop.f32.mrf.mxu0
        %v526 = vadd.f32 %v331, %v525
        %527 = vmatmul.bf16.gmra.mxu0 %v385
        %v528 = vpop.f32.mrf.mxu0
        %v529 = vadd.f32 %v331, %v528
        %v530 = vpop.f32.mrf.mxu0
        %v531 = vadd.f32 %v331, %v530
        %532 = vmatmul.bf16.gmra.mxu0 %v387
        %v533 = vpop.f32.mrf.mxu0
        %v534 = vadd.f32 %v331, %v533
        %v535 = vpop.f32.mrf.mxu0
        %v536 = vadd.f32 %v331, %v535
        %537 = vmatmul.bf16.gmra.mxu0 %v389
        %v538 = vpop.f32.mrf.mxu0
        %v539 = vadd.f32 %v331, %v538
        %v540 = vpop.f32.mrf.mxu0
        %v541 = vadd.f32 %v331, %v540
        %542 = vmatmul.bf16.gmra.mxu0 %v391
        %v543 = vpop.f32.mrf.mxu0
        %v544 = vadd.f32 %v331, %v543
        %v545 = vpop.f32.mrf.mxu0
        %v546 = vadd.f32 %v331, %v545
        %547 = vmatmul.bf16.gmra.mxu0 %v393
        %v548 = vpop.f32.mrf.mxu0
        %v549 = vadd.f32 %v331, %v548
        %v550 = vpop.f32.mrf.mxu0
        %v551 = vadd.f32 %v331, %v550
        %552 = vmatmul.bf16.gmra.mxu0 %v395
        %v553 = vpop.f32.mrf.mxu0
        %v554 = vadd.f32 %v331, %v553
        %v555 = vpop.f32.mrf.mxu0
        %v556 = vadd.f32 %v331, %v555
        %557 = vdwg.mxu0
        %558 = vmatpush.bf16.msra.mxu0 %v492
        %559 = vmatpush.bf16.msra.mxu0 %v491
        %560 = vmatpush.bf16.msra.mxu0 %v490
        %561 = vmatpush.bf16.msra.mxu0 %v489
        %562 = vmatpush.bf16.msra.mxu0 %v488
        %563 = vmatpush.bf16.msra.mxu0 %v487
        %564 = vmatpush.bf16.msra.mxu0 %v486
        %565 = vmatpush.bf16.msra.mxu0 %v485
        %566 = vmatmul.bf16.gmra.mxu0 %v382
        %v567 = vpop.f32.mrf.mxu0
        %v568 = vadd.f32 %v519, %v567
        %v569 = vpop.f32.mrf.mxu0
        %v570 = vadd.f32 %v521, %v569
        %571 = vmatmul.bf16.gmra.mxu0 %v384
        %v572 = vpop.f32.mrf.mxu0
        %v573 = vadd.f32 %v524, %v572
        %v574 = vpop.f32.mrf.mxu0
        %v575 = vadd.f32 %v526, %v574
        %576 = vmatmul.bf16.gmra.mxu0 %v386
        %v577 = vpop.f32.mrf.mxu0
        %v578 = vadd.f32 %v529, %v577
        %v579 = vpop.f32.mrf.mxu0
        %v580 = vadd.f32 %v531, %v579
        %581 = vmatmul.bf16.gmra.mxu0 %v388
        %v582 = vpop.f32.mrf.mxu0
        %v583 = vadd.f32 %v534, %v582
        %v584 = vpop.f32.mrf.mxu0
        %v585 = vadd.f32 %v536, %v584
        %586 = vmatmul.bf16.gmra.mxu0 %v390
        %v587 = vpop.f32.mrf.mxu0
        %v588 = vadd.f32 %v539, %v587
        %v589 = vpop.f32.mrf.mxu0
        %v590 = vadd.f32 %v541, %v589
        %591 = vmatmul.bf16.gmra.mxu0 %v392
        %v592 = vpop.f32.mrf.mxu0
        %v593 = vadd.f32 %v544, %v592
        %v594 = vpop.f32.mrf.mxu0
        %v595 = vadd.f32 %v546, %v594
        %596 = vmatmul.bf16.gmra.mxu0 %v394
        %v597 = vpop.f32.mrf.mxu0
        %v598 = vadd.f32 %v549, %v597
        %v599 = vpop.f32.mrf.mxu0
        %v600 = vadd.f32 %v551, %v599
        %601 = vmatmul.bf16.gmra.mxu0 %v396
        %v602 = vpop.f32.mrf.mxu0
        %v603 = vadd.f32 %v554, %v602
        %v604 = vpop.f32.mrf.mxu0
        %v605 = vadd.f32 %v556, %v604
        %606 = vdwg.mxu0
        %v607 = vmax.f32 %v568, 0.0
        %v608 = vmax.f32 %v570, 0.0
        %v609 = vmax.f32 %v573, 0.0
        %v610 = vmax.f32 %v575, 0.0
        %v611 = vmax.f32 %v578, 0.0
        %v612 = vmax.f32 %v580, 0.0
        %v613 = vmax.f32 %v583, 0.0
        %v614 = vmax.f32 %v585, 0.0
        %v615 = vmax.f32 %v588, 0.0
        %v616 = vmax.f32 %v590, 0.0
        %v617 = vmax.f32 %v593, 0.0
        %v618 = vmax.f32 %v595, 0.0
        %v619 = vmax.f32 %v598, 0.0
        %v620 = vmax.f32 %v600, 0.0
        %v621 = vmax.f32 %v603, 0.0
        %v622 = vmax.f32 %v605, 0.0
        %v623 = vpack.c.bf16 %v608, %v607
        %v624 = vpack.c.bf16 %v610, %v609
        %v625 = vpack.c.bf16 %v612, %v611
        %v626 = vpack.c.bf16 %v614, %v613
        %v627 = vpack.c.bf16 %v616, %v615
        %v628 = vpack.c.bf16 %v618, %v617
        %v629 = vpack.c.bf16 %v620, %v619
        %v630 = vpack.c.bf16 %v622, %v621
        %v631 = vld [vmem:[#allocation7] sm:$0xf]
        %v632 = vld [vmem:[#allocation7 + $0x4] sm:$0xf]
        %v633 = vld [vmem:[#allocation7 + $0x8] sm:$0xf]
        %v634 = vld [vmem:[#allocation7 + $0xc] sm:$0xf]
        %v635 = vld [vmem:[#allocation7 + $0x10] sm:$0xf]
        %v636 = vld [vmem:[#allocation7 + $0x14] sm:$0xf]
        %v637 = vld [vmem:[#allocation7 + $0x18] sm:$0xf]
        %v638 = vld [vmem:[#allocation7 + $0x1c] sm:$0xf]
        %v639 = vld [vmem:[#allocation7 + $0x20] sm:$0xf]
        %v640 = vld [vmem:[#allocation7 + $0x24] sm:$0xf]
        %v641 = vld [vmem:[#allocation7 + $0x28] sm:$0xf]
        %v642 = vld [vmem:[#allocation7 + $0x2c] sm:$0xf]
        %v643 = vld [vmem:[#allocation7 + $0x30] sm:$0xf]
        %v644 = vld [vmem:[#allocation7 + $0x34] sm:$0xf]
        %v645 = vld [vmem:[#allocation7 + $0x38] sm:$0xf]
        %v646 = vld [vmem:[#allocation7 + $0x3c] sm:$0xf]
        %v647 = vld [vmem:[%s4] sm:$0x1]
        %v649 = vperm.slane %v647, 0
        %v667 = vunpack.c.l.b16 %v631
        %v668 = vunpack.c.l.b16 %v632
        %v669 = vunpack.c.l.b16 %v633
        %v670 = vunpack.c.l.b16 %v634
        %v671 = vunpack.c.l.b16 %v635
        %v672 = vunpack.c.l.b16 %v636
        %v673 = vunpack.c.l.b16 %v637
        %v674 = vunpack.c.l.b16 %v638
        %v675 = vunpack.c.l.b16 %v639
        %v676 = vunpack.c.l.b16 %v640
        %v677 = vunpack.c.l.b16 %v641
        %v678 = vunpack.c.l.b16 %v642
        %v679 = vunpack.c.l.b16 %v643
        %v680 = vunpack.c.l.b16 %v644
        %v681 = vunpack.c.l.b16 %v645
        %v682 = vunpack.c.l.b16 %v646
        %v683 = vpack.c.b16 %v668, %v667
        %v684 = vpack.c.b16 %v670, %v669
        %v685 = vpack.c.b16 %v672, %v671
        %v686 = vpack.c.b16 %v674, %v673
        %v687 = vpack.c.b16 %v676, %v675
        %v688 = vpack.c.b16 %v678, %v677
        %v689 = vpack.c.b16 %v680, %v679
        %v690 = vpack.c.b16 %v682, %v681
        %699 = vmatpush.bf16.msra.mxu0 %v690
        %700 = vmatpush.bf16.msra.mxu0 %v689
        %701 = vmatpush.bf16.msra.mxu0 %v688
        %702 = vmatpush.bf16.msra.mxu0 %v687
        %703 = vmatpush.bf16.msra.mxu0 %v686
        %704 = vmatpush.bf16.msra.mxu0 %v685
        %705 = vmatpush.bf16.msra.mxu0 %v684
        %706 = vmatpush.bf16.msra.mxu0 %v683
        %707 = vmatmul.bf16.gmra.mxu0 %v623
        %v708 = vpop.f32.mrf.mxu0
        %v709 = vadd.f32 %v649, %v708
        %v710 = vpop.f32.mrf.mxu0
        %v711 = vadd.f32 %v649, %v710
        %712 = vmatmul.bf16.gmra.mxu0 %v624
        %v713 = vpop.f32.mrf.mxu0
        %v714 = vadd.f32 %v649, %v713
        %v715 = vpop.f32.mrf.mxu0
        %v716 = vadd.f32 %v649, %v715
        %717 = vmatmul.bf16.gmra.mxu0 %v625
        %v718 = vpop.f32.mrf.mxu0
        %v719 = vadd.f32 %v649, %v718
        %v720 = vpop.f32.mrf.mxu0
        %v721 = vadd.f32 %v649, %v720
        %722 = vmatmul.bf16.gmra.mxu0 %v626
        %v723 = vpop.f32.mrf.mxu0
        %v724 = vadd.f32 %v649, %v723
        %v725 = vpop.f32.mrf.mxu0
        %v726 = vadd.f32 %v649, %v725
        %727 = vmatmul.bf16.gmra.mxu0 %v627
        %v728 = vpop.f32.mrf.mxu0
        %v729 = vadd.f32 %v649, %v728
        %v730 = vpop.f32.mrf.mxu0
        %v731 = vadd.f32 %v649, %v730
        %732 = vmatmul.bf16.gmra.mxu0 %v628
        %v733 = vpop.f32.mrf.mxu0
        %v734 = vadd.f32 %v649, %v733
        %v735 = vpop.f32.mrf.mxu0
        %v736 = vadd.f32 %v649, %v735
        %737 = vmatmul.bf16.gmra.mxu0 %v629
        %v738 = vpop.f32.mrf.mxu0
        %v739 = vadd.f32 %v649, %v738
        %v740 = vpop.f32.mrf.mxu0
        %v741 = vadd.f32 %v649, %v740
        %742 = vmatmul.bf16.gmra.mxu0 %v630
        %v743 = vpop.f32.mrf.mxu0
        %v744 = vadd.f32 %v649, %v743
        %v745 = vpop.f32.mrf.mxu0
        %v746 = vadd.f32 %v649, %v745
        %747 = vdwg.mxu0
        %748 = vst [vmem:[%s278] sm:$0xff] %v709
        %749 = vst [vmem:[%s278 + $0x8] sm:$0xff] %v711
        %750 = vst [vmem:[%s278 + $0x10] sm:$0xff] %v714
        %751 = vst [vmem:[%s278 + $0x18] sm:$0xff] %v716
        %752 = vst [vmem:[%s278 + $0x20] sm:$0xff] %v719
        %753 = vst [vmem:[%s278 + $0x28] sm:$0xff] %v721
        %754 = vst [vmem:[%s278 + $0x30] sm:$0xff] %v724
        %755 = vst [vmem:[%s278 + $0x38] sm:$0xff] %v726
        %756 = vst [vmem:[%s278 + $0x40] sm:$0xff] %v729
        %757 = vst [vmem:[%s278 + $0x48] sm:$0xff] %v731
        %758 = vst [vmem:[%s278 + $0x50] sm:$0xff] %v734
        %759 = vst [vmem:[%s278 + $0x58] sm:$0xff] %v736
        %760 = vst [vmem:[%s278 + $0x60] sm:$0xff] %v739
        %761 = vst [vmem:[%s278 + $0x68] sm:$0xff] %v741
        %762 = vst [vmem:[%s278 + $0x70] sm:$0xff] %v744
        %763 = vst [vmem:[%s278 + $0x78] sm:$0xff] %v746
        %s764 = sand.u32 %s141, 1
        %s765 = scalar_lea.sflag [#allocation4], %s764
        %s766 = sand.u32 %s141, 1
        %s767 = smul.addr %s766, 128
        %s768 = scalar_lea.vmem [#allocation8], %s767
        // Predicated region
        $region53: #{tpu_custom_call.1} parent=39 // pred_check
          %p769 = pneg %p151
        $region54: #{tpu_custom_call.1} parent=39 // pred_check_branch
          %771 = sbr.rel (%p769) target = $region56
        $region55: #{tpu_custom_call.1} parent=39 // pred_region
          %s772 = smul.u32 16, %s23
          %774 = vsyncadd %s765, 0
          %s775 = smul.addr %s772, 8
          %s776 = scalar_lea.hbm %s5, %s775
          %s777 = sshll.u32 %s768, 4
          %s778 = int_to_ptr.vmem [resolvable:$true] %s777
          %s779 = sshll.u32 %s776, 4
          %s780 = int_to_ptr.hbm [resolvable:$true] %s779
          %785 = dma.vmem_to_hbm [thread:$0]  %s778, 2048, %s780, %s765, 128, 128, 8
        $region56: #{tpu_custom_call.1} parent=39 // pred_fallthru
          _
      $region40: #{tpu_custom_call.1} parent=5 // pred_fallthru
        _
      %p786 = scmp.le.s32.totalorder 2, %s18
      // Predicated region
      $region57: #{tpu_custom_call.1} parent=5 // pred_check
        %p787 = pneg %p786
      $region58: #{tpu_custom_call.1} parent=5 // pred_check_branch
        %789 = sbr.rel (%p787) target = $region60
      $region59: #{tpu_custom_call.1} parent=5 // pred_region
        %s790 = ssub.s32 %s18, 2
        // Predicated region
        $region61: #{tpu_custom_call.1} parent=59 // pred_check
          %p791 = pneg %p157
        $region62: #{tpu_custom_call.1} parent=59 // pred_check_branch
          %793 = sbr.rel (%p791) target = $region64
        $region63: #{tpu_custom_call.1} parent=59 // pred_region
          %s794 = sand.u32 %s142, 1
          %s795 = scalar_lea.sflag [#allocation4], %s794
          %s796 = sand.u32 %s142, 1
          %s797 = smul.addr %s796, 128
          %s798 = scalar_lea.vmem [#allocation8], %s797
          %800 = dma.done %s795, 2048
        $region64: #{tpu_custom_call.1} parent=59 // pred_fallthru
          _
      $region60: #{tpu_custom_call.1} parent=5 // pred_fallthru
        _
    $region6: #{tpu_custom_call.1} parent=1 // loop_footer
      %s22 = sadd.s32 1, %s18
    $region7: #{tpu_custom_call.1} parent=1 // loop_footer_branch
      %17 = sbr.rel target = $region3
    $region8: #{tpu_custom_call.1} parent=1 // loop_exit
      _
    %801 = vsyncpa [#allocation3], 1
    %s802 = scalar_lea.sflag [#allocation3], 1
    %803 = vsyncpa %s802, 1
    %804 = vsyncpa [#allocation6], 1
    %805 = vsyncpa [#allocation4], 1
    %s806 = scalar_lea.sflag [#allocation4], 1
    %807 = vsyncpa %s806, 1

</llo_original>
